<compile_context>
chip_gen: v7x
topology: tpu7x:2x2x1
jax: 0.10.0
libtpu: 0.0.40
codegen_flags: <defaults>
</compile_context>

<pallas_src>
import functools
import math

import jax
import jax.numpy as jnp
from jax.experimental import pallas as pl
from jax.experimental.pallas import tpu as pltpu

LANE = 128      # fast (lane) axis of a vreg
SUBLANE = 8     # slow (sublane) axis of a vreg


def _round_up(n: int, m: int) -> int:
    return (n + m - 1) // m * m


def _activate(x, activation: str, logical_width: int):
    """Mirror of Perceptron.__activate, applied to a lane-padded f32 tile."""
    if activation == "sigmoid":
        return jax.nn.sigmoid(x)
    elif activation == "softmax":
        # Padded lanes must not contribute exp(0)=1.
        lane = jax.lax.broadcasted_iota(jnp.int32, x.shape, dimension=1)
        x = jnp.where(lane < logical_width, x, -jnp.inf)
        return jax.nn.softmax(x, axis=1)
    elif activation == "abs":
        return jnp.abs(x)
    elif activation == "relu":
        return jnp.maximum(x, 0.0)
    elif activation == "leaky-relu":
        return jnp.maximum(x, 0.01 * x)
    return x


def _mlp_fused_kernel(*refs, out_dims, activations):
    """Fused MLP: refs = (x_ref, w0, b0, w1, b1, ..., wL, bL, o_ref).

    Per-layer intermediates stay as jnp values (vregs); only the final
    activation is stored.  Matmuls run with bf16 operands, f32 accumulation.
    """
    x_ref, o_ref = refs[0], refs[-1]
    param_refs = refs[1:-1]

    h = x_ref[...]                                           # (TB, K0) f32
    for li, (act, width) in enumerate(zip(activations, out_dims)):
        w = param_refs[2 * li][...]                          # (K, out_pad) bf16
        b = param_refs[2 * li + 1][...]                      # (1, out_pad) f32
        y = jnp.dot(h.astype(jnp.bfloat16), w,
                    preferred_element_type=jnp.float32) + b
        h = _activate(y, act, width)
    o_ref[...] = h.astype(o_ref.dtype)


def init_perceptron_params(key, dimension, sizes):
    """Init matching torch.nn.Linear default (U[-1/sqrt(fan_in), 1/sqrt(fan_in)]).

    Weights are stored transposed (in, out) in bfloat16.  The out dim is
    zero-padded to a multiple of 128 (lane-dense MXU operand / store).  The K
    (in) dim of layer i>0 is the previous layer's *padded* width with zero
    rows (so padded lanes are annihilated for any hidden activation); layer 0
    keeps the logical input dimension so x itself needs no lane padding.
    Biases are (1, out_pad) f32.
    """
    params = []
    logical_in = dimension
    padded_in = dimension
    for size in sizes:
        key, kw, kb = jax.random.split(key, 3)
        bound = 1.0 / math.sqrt(logical_in)
        w_t = jax.random.uniform(kw, (logical_in, size), jnp.float32, -bound, bound)
        b = jax.random.uniform(kb, (1, size), jnp.float32, -bound, bound)

        out_pad = _round_up(size, LANE)
        w_p = (jnp.zeros((padded_in, out_pad), jnp.float32)
               .at[:logical_in, :size].set(w_t)).astype(jnp.bfloat16)
        b_p = jnp.zeros((1, out_pad), jnp.float32).at[:, :size].set(b)
        params.append((w_p, b_p))
        logical_in = size
        padded_in = out_pad
    return params


def _auto_batch_tile(B, in_width, out_width, resident_weight_bytes):
    """Largest 8-aligned batch tile that keeps the double-buffered x / out
    streams plus the resident weights inside a budget that is safe on
    v5e/v6e/v7x; split into >= 2 grid steps when possible (v7x megacore)."""
    B8 = _round_up(B, SUBLANE)
    budget = (24 << 20) - resident_weight_bytes          # conservative scoped VMEM
    per_row = 2 * (in_width + out_width) * 4             # 2x-buffered f32 streams
    tb = budget // max(per_row, 1)
    tb = max(SUBLANE, min(1024, (tb // SUBLANE) * SUBLANE))
    tb = min(tb, B8)
    if B8 >= 2 * SUBLANE and tb >= B8:
        # >= 2 grid steps -> "parallel" axis can shard across both v7x TCs.
        tb = _round_up((B8 + 1) // 2, SUBLANE)
    return tb


def perceptron_forward(x, params, sizes, activation="abs",
                       output_activation="sigmoid", batch_tile=None,
                       out_dtype=jnp.float32):
    """Run the whole MLP as one fused Pallas kernel.

    x      : (B, dimension) float32 (unpadded logical input; streamed as-is)
    params : list of (w_bf16, b_f32) from init_perceptron_params
    sizes  : logical layer widths (same as the PyTorch module's `sizes`)
    """
    B, D = x.shape
    assert D == params[0][0].shape[0]
    assert all(s > 0 for s in sizes)
    out_pad_last = params[-1][0].shape[1]
    n_layers = len(params)

    resident_weight_bytes = sum(
        w.size * w.dtype.itemsize + b.size * b.dtype.itemsize for (w, b) in params)

    B8 = _round_up(B, SUBLANE)
    if batch_tile is None:
        TB = _auto_batch_tile(B, D, out_pad_last, resident_weight_bytes)
    else:
        TB = min(_round_up(batch_tile, SUBLANE), B8)
    grid = (pl.cdiv(B, TB),)   # ragged batch: last tile partial, stores masked

    activations = tuple([activation] * (n_layers - 1) + [output_activation])
    kernel = functools.partial(_mlp_fused_kernel,
                               out_dims=tuple(sizes),
                               activations=activations)

    flat_params = []
    for (w_p, b_p) in params:
        flat_params += [w_p, b_p]

    # Explicit VMEM budget so behaviour matches on v6e (128 MiB) and v7x (64 MiB/TC).
    stream_bytes = 2 * TB * (D + out_pad_last) * 4
    vmem_limit = int(min(max(2 * resident_weight_bytes + 2 * stream_bytes + (8 << 20),
                             32 << 20), 64 << 20))

    def _call(weight_pipeline_mode):
        in_specs = [pl.BlockSpec((TB, D), lambda i: (i, 0))]
        for (w_p, b_p) in params:
            if weight_pipeline_mode is None:
                in_specs.append(pl.BlockSpec(w_p.shape, lambda i: (0, 0)))
                in_specs.append(pl.BlockSpec(b_p.shape, lambda i: (0, 0)))
            else:
                # Constant index_map -> fetched once; single-buffer to halve
                # resident weight VMEM.
                in_specs.append(pl.BlockSpec(w_p.shape, lambda i: (0, 0),
                                             pipeline_mode=weight_pipeline_mode))
                in_specs.append(pl.BlockSpec(b_p.shape, lambda i: (0, 0),
                                             pipeline_mode=weight_pipeline_mode))
        return pl.pallas_call(
            kernel,
            out_shape=jax.ShapeDtypeStruct((B, out_pad_last), out_dtype),
            grid_spec=pltpu.PrefetchScalarGridSpec(
                num_scalar_prefetch=0,
                grid=grid,
                in_specs=in_specs,
                out_specs=pl.BlockSpec((TB, out_pad_last), lambda i: (i, 0)),
            ),
            compiler_params=pltpu.CompilerParams(
                dimension_semantics=("parallel",),
                vmem_limit_bytes=vmem_limit,
            ),
        )(x, *flat_params)

    try:
        out = _call(pl.Buffered(1))
    except Exception:
        # Fallback if this JAX build rejects single-buffering; default
        # double-buffering is functionally identical.
        out = _call(None)

    # Lane slice back to the logical output width (rows already logical B).
    return out[:, :sizes[-1]]


def _reference_forward(x, params, dims, activation, output_activation):
    """Pure-JAX reference replicating the kernel's bf16-operand matmuls on the
    UNPADDED weight slices."""
    h = x
    n = len(params)
    for li, (w_p, b_p) in enumerate(params):
        in_d, out_d = dims[li], dims[li + 1]
        w = w_p[:in_d, :out_d]
        b = b_p[:, :out_d]
        y = jnp.dot(h.astype(jnp.bfloat16), w,
                    preferred_element_type=jnp.float32) + b
        act = activation if li < n - 1 else output_activation
        if act == "sigmoid":
            h = jax.nn.sigmoid(y)
        elif act == "softmax":
            h = jax.nn.softmax(y, axis=1)
        elif act == "abs":
            h = jnp.abs(y)
        elif act == "relu":
            h = jnp.maximum(y, 0.0)
        elif act == "leaky-relu":
            h = jnp.maximum(y, 0.01 * y)
        else:
            h = y
    return h


if __name__ == "__main__":
    key = jax.random.PRNGKey(0)
    kx, kp, kx2 = jax.random.split(key, 3)

    batch = 8
    dimension = 32
    sizes = [64, 48, 16]  # two hidden layers (abs) + output layer (sigmoid)
    dims = [dimension] + sizes

    params = init_perceptron_params(kp, dimension, sizes)

    # Small batch (single grid step).
    x = jax.random.normal(kx, (batch, dimension), dtype=jnp.float32)
    out = perceptron_forward(x, params, sizes,
                             activation="abs", output_activation="sigmoid")
    out = jax.block_until_ready(out)
    ref = _reference_forward(x, params, dims, "abs", "sigmoid")
    assert out.shape == (batch, sizes[-1])
    assert jnp.allclose(out, ref, atol=1e-2, rtol=1e-2), \
        float(jnp.max(jnp.abs(out - ref)))

    # Larger, non-8-aligned, non-tile-aligned batch exercises the ragged batch
    # grid (partial last tile, masked stores) and the auto batch-tile path.
    batch2 = 300
    x2 = jax.random.normal(kx2, (batch2, dimension), dtype=jnp.float32)
    out2 = perceptron_forward(x2, params, sizes,
                              activation="abs", output_activation="sigmoid")
    out2 = jax.block_until_ready(out2)
    ref2 = _reference_forward(x2, params, dims, "abs", "sigmoid")
    assert out2.shape == (batch2, sizes[-1])
    assert jnp.allclose(out2, ref2, atol=1e-2, rtol=1e-2), \
        float(jnp.max(jnp.abs(out2 - ref2)))

    # Explicit batch_tile path (multi-step grid with a fixed tile).
    out3 = perceptron_forward(x2, params, sizes,
                              activation="abs", output_activation="sigmoid",
                              batch_tile=128)
    out3 = jax.block_until_ready(out3)
    assert jnp.allclose(out3, ref2, atol=1e-2, rtol=1e-2)

    print("KERNEL_OK")
</pallas_src>

<mosaic_0001>
module attributes {stable_mosaic.version = 11 : i64} {
  func.func @_mlp_fused_kernel(%arg0: i32, %arg1: memref<8x32xf32, #tpu.memory_space<vmem>>, %arg2: memref<32x128xbf16, #tpu.memory_space<vmem>>, %arg3: memref<1x128xf32, #tpu.memory_space<vmem>>, %arg4: memref<128x128xbf16, #tpu.memory_space<vmem>>, %arg5: memref<1x128xf32, #tpu.memory_space<vmem>>, %arg6: memref<128x128xbf16, #tpu.memory_space<vmem>>, %arg7: memref<1x128xf32, #tpu.memory_space<vmem>>, %arg8: memref<8x128xf32, #tpu.memory_space<vmem>>) attributes {dimension_semantics = [#tpu.dimension_semantics<parallel>], iteration_bounds = array<i64: 1>, scalar_prefetch = 0 : i64, scratch_operands = 0 : i64, tpu.core_type = #tpu.core_type<tc>, window_params = [{transform_indices = @transform_0, window_bounds = array<i64: 8, 32>}, {pipeline_mode = #tpu.pipeline_mode<synchronous>, transform_indices = @transform_1, window_bounds = array<i64: 32, 128>}, {pipeline_mode = #tpu.pipeline_mode<synchronous>, transform_indices = @transform_2, window_bounds = array<i64: 1, 128>}, {pipeline_mode = #tpu.pipeline_mode<synchronous>, transform_indices = @transform_3, window_bounds = array<i64: 128, 128>}, {pipeline_mode = #tpu.pipeline_mode<synchronous>, transform_indices = @transform_4, window_bounds = array<i64: 1, 128>}, {pipeline_mode = #tpu.pipeline_mode<synchronous>, transform_indices = @transform_5, window_bounds = array<i64: 128, 128>}, {pipeline_mode = #tpu.pipeline_mode<synchronous>, transform_indices = @transform_6, window_bounds = array<i64: 1, 128>}, {transform_indices = @transform_7, window_bounds = array<i64: 8, 128>}]} {
    %c0 = arith.constant 0 : index
    %c0_0 = arith.constant 0 : index
    %0 = vector.load %arg1[%c0, %c0_0] : memref<8x32xf32, #tpu.memory_space<vmem>>, vector<8x32xf32>
    %c0_1 = arith.constant 0 : index
    %c0_2 = arith.constant 0 : index
    %1 = vector.load %arg2[%c0_1, %c0_2] : memref<32x128xbf16, #tpu.memory_space<vmem>>, vector<32x128xbf16>
    %c0_3 = arith.constant 0 : index
    %c0_4 = arith.constant 0 : index
    %2 = vector.load %arg3[%c0_3, %c0_4] : memref<1x128xf32, #tpu.memory_space<vmem>>, vector<1x128xf32>
    %3 = arith.truncf %0 : vector<8x32xf32> to vector<8x32xbf16>
    %cst = arith.constant dense<0.000000e+00> : vector<8x128xf32>
    %4 = tpu.matmul %3, %1, %cst {dimension_numbers = #tpu.dot_dimension_numbers<[1], [0], [0], [1], [0, 0, 1, 1], [], []>} : vector<8x32xbf16>, vector<32x128xbf16>, vector<8x128xf32> -> vector<8x128xf32>
    %5 = vector.broadcast %2 : vector<1x128xf32> to vector<8x128xf32>
    %6 = arith.addf %4, %5 : vector<8x128xf32>
    %7 = math.absf %6 : vector<8x128xf32>
    %c0_5 = arith.constant 0 : index
    %c0_6 = arith.constant 0 : index
    %8 = vector.load %arg4[%c0_5, %c0_6] : memref<128x128xbf16, #tpu.memory_space<vmem>>, vector<128x128xbf16>
    %c0_7 = arith.constant 0 : index
    %c0_8 = arith.constant 0 : index
    %9 = vector.load %arg5[%c0_7, %c0_8] : memref<1x128xf32, #tpu.memory_space<vmem>>, vector<1x128xf32>
    %10 = arith.truncf %7 : vector<8x128xf32> to vector<8x128xbf16>
    %cst_9 = arith.constant dense<0.000000e+00> : vector<8x128xf32>
    %11 = tpu.matmul %10, %8, %cst_9 {dimension_numbers = #tpu.dot_dimension_numbers<[1], [0], [0], [1], [0, 0, 1, 1], [], []>} : vector<8x128xbf16>, vector<128x128xbf16>, vector<8x128xf32> -> vector<8x128xf32>
    %12 = vector.broadcast %9 : vector<1x128xf32> to vector<8x128xf32>
    %13 = arith.addf %11, %12 : vector<8x128xf32>
    %14 = math.absf %13 : vector<8x128xf32>
    %c0_10 = arith.constant 0 : index
    %c0_11 = arith.constant 0 : index
    %15 = vector.load %arg6[%c0_10, %c0_11] : memref<128x128xbf16, #tpu.memory_space<vmem>>, vector<128x128xbf16>
    %c0_12 = arith.constant 0 : index
    %c0_13 = arith.constant 0 : index
    %16 = vector.load %arg7[%c0_12, %c0_13] : memref<1x128xf32, #tpu.memory_space<vmem>>, vector<1x128xf32>
    %17 = arith.truncf %14 : vector<8x128xf32> to vector<8x128xbf16>
    %cst_14 = arith.constant dense<0.000000e+00> : vector<8x128xf32>
    %18 = tpu.matmul %17, %15, %cst_14 {dimension_numbers = #tpu.dot_dimension_numbers<[1], [0], [0], [1], [0, 0, 1, 1], [], []>} : vector<8x128xbf16>, vector<128x128xbf16>, vector<8x128xf32> -> vector<8x128xf32>
    %19 = vector.broadcast %16 : vector<1x128xf32> to vector<8x128xf32>
    %20 = arith.addf %18, %19 : vector<8x128xf32>
    %21 = arith.negf %20 : vector<8x128xf32>
    %22 = math.exp %21 : vector<8x128xf32>
    %cst_15 = arith.constant 1.000000e+00 : f32
    %23 = vector.broadcast %cst_15 : f32 to vector<8x128xf32>
    %24 = arith.addf %23, %22 : vector<8x128xf32>
    %25 = arith.divf %23, %24 : vector<8x128xf32>
    %c0_16 = arith.constant 0 : index
    %c0_17 = arith.constant 0 : index
    %26 = vector.load %arg8[%c0_16, %c0_17] : memref<8x128xf32, #tpu.memory_space<vmem>>, vector<8x128xf32>
    tpu.vector_store %arg8[%c0_16, %c0_17], %25 {strides = array<i32>} : memref<8x128xf32, #tpu.memory_space<vmem>>, vector<8x128xf32>,
    return
  }
  func.func @transform_0(%arg0: i32) -> (i32, i32) {
    %c0_i32 = arith.constant 0 : i32
    %c0_i32_0 = arith.constant 0 : i32
    return %arg0, %c0_i32 : i32, i32
  }
  func.func @transform_1(%arg0: i32) -> (i32, i32) {
    %c0_i32 = arith.constant 0 : i32
    %c0_i32_0 = arith.constant 0 : i32
    %c0_i32_1 = arith.constant 0 : i32
    return %c0_i32, %c0_i32_0 : i32, i32
  }
  func.func @transform_2(%arg0: i32) -> (i32, i32) {
    %c0_i32 = arith.constant 0 : i32
    %c0_i32_0 = arith.constant 0 : i32
    %c0_i32_1 = arith.constant 0 : i32
    return %c0_i32, %c0_i32_0 : i32, i32
  }
  func.func @transform_3(%arg0: i32) -> (i32, i32) {
    %c0_i32 = arith.constant 0 : i32
    %c0_i32_0 = arith.constant 0 : i32
    %c0_i32_1 = arith.constant 0 : i32
    return %c0_i32, %c0_i32_0 : i32, i32
  }
  func.func @transform_4(%arg0: i32) -> (i32, i32) {
    %c0_i32 = arith.constant 0 : i32
    %c0_i32_0 = arith.constant 0 : i32
    %c0_i32_1 = arith.constant 0 : i32
    return %c0_i32, %c0_i32_0 : i32, i32
  }
  func.func @transform_5(%arg0: i32) -> (i32, i32) {
    %c0_i32 = arith.constant 0 : i32
    %c0_i32_0 = arith.constant 0 : i32
    %c0_i32_1 = arith.constant 0 : i32
    return %c0_i32, %c0_i32_0 : i32, i32
  }
  func.func @transform_6(%arg0: i32) -> (i32, i32) {
    %c0_i32 = arith.constant 0 : i32
    %c0_i32_0 = arith.constant 0 : i32
    %c0_i32_1 = arith.constant 0 : i32
    return %c0_i32, %c0_i32_0 : i32, i32
  }
  func.func @transform_7(%arg0: i32) -> (i32, i32) {
    %c0_i32 = arith.constant 0 : i32
    %c0_i32_0 = arith.constant 0 : i32
    return %arg0, %c0_i32 : i32, i32
  }
}

module attributes {stable_mosaic.version = 11 : i64} {
  func.func @_mlp_fused_kernel(%arg0: i32, %arg1: memref<8x32xf32, #tpu.memory_space<vmem>>, %arg2: memref<32x128xbf16, #tpu.memory_space<vmem>>, %arg3: memref<1x128xf32, #tpu.memory_space<vmem>>, %arg4: memref<128x128xbf16, #tpu.memory_space<vmem>>, %arg5: memref<1x128xf32, #tpu.memory_space<vmem>>, %arg6: memref<128x128xbf16, #tpu.memory_space<vmem>>, %arg7: memref<1x128xf32, #tpu.memory_space<vmem>>, %arg8: memref<8x128xf32, #tpu.memory_space<vmem>>) attributes {dimension_semantics = [#tpu.dimension_semantics<parallel>], iteration_bounds = array<i64: 1>, scalar_prefetch = 0 : i64, scratch_operands = 0 : i64, tpu.core_type = #tpu.core_type<tc>, window_params = [{transform_indices = @transform_0, window_bounds = array<i64: 8, 32>}, {pipeline_mode = #tpu.pipeline_mode<synchronous>, transform_indices = @transform_1, window_bounds = array<i64: 32, 128>}, {pipeline_mode = #tpu.pipeline_mode<synchronous>, transform_indices = @transform_2, window_bounds = array<i64: 1, 128>}, {pipeline_mode = #tpu.pipeline_mode<synchronous>, transform_indices = @transform_3, window_bounds = array<i64: 128, 128>}, {pipeline_mode = #tpu.pipeline_mode<synchronous>, transform_indices = @transform_4, window_bounds = array<i64: 1, 128>}, {pipeline_mode = #tpu.pipeline_mode<synchronous>, transform_indices = @transform_5, window_bounds = array<i64: 128, 128>}, {pipeline_mode = #tpu.pipeline_mode<synchronous>, transform_indices = @transform_6, window_bounds = array<i64: 1, 128>}, {transform_indices = @transform_7, window_bounds = array<i64: 8, 128>}]} {
    %c0 = arith.constant 0 : index
    %c0_0 = arith.constant 0 : index
    %0 = vector.load %arg1[%c0, %c0_0] : memref<8x32xf32, #tpu.memory_space<vmem>>, vector<8x32xf32>
    %c0_1 = arith.constant 0 : index
    %c0_2 = arith.constant 0 : index
    %1 = vector.load %arg2[%c0_1, %c0_2] : memref<32x128xbf16, #tpu.memory_space<vmem>>, vector<32x128xbf16>
    %c0_3 = arith.constant 0 : index
    %c0_4 = arith.constant 0 : index
    %2 = vector.load %arg3[%c0_3, %c0_4] : memref<1x128xf32, #tpu.memory_space<vmem>>, vector<1x128xf32>
    %3 = arith.truncf %0 : vector<8x32xf32> to vector<8x32xbf16>
    %cst = arith.constant dense<0.000000e+00> : vector<8x128xf32>
    %4 = tpu.matmul %3, %1, %cst {dimension_numbers = #tpu.dot_dimension_numbers<[1], [0], [0], [1], [0, 0, 1, 1], [], []>} : vector<8x32xbf16>, vector<32x128xbf16>, vector<8x128xf32> -> vector<8x128xf32>
    %5 = vector.broadcast %2 : vector<1x128xf32> to vector<8x128xf32>
    %6 = arith.addf %4, %5 : vector<8x128xf32>
    %7 = math.absf %6 : vector<8x128xf32>
    %c0_5 = arith.constant 0 : index
    %c0_6 = arith.constant 0 : index
    %8 = vector.load %arg4[%c0_5, %c0_6] : memref<128x128xbf16, #tpu.memory_space<vmem>>, vector<128x128xbf16>
    %c0_7 = arith.constant 0 : index
    %c0_8 = arith.constant 0 : index
    %9 = vector.load %arg5[%c0_7, %c0_8] : memref<1x128xf32, #tpu.memory_space<vmem>>, vector<1x128xf32>
    %10 = arith.truncf %7 : vector<8x128xf32> to vector<8x128xbf16>
    %cst_9 = arith.constant dense<0.000000e+00> : vector<8x128xf32>
    %11 = tpu.matmul %10, %8, %cst_9 {dimension_numbers = #tpu.dot_dimension_numbers<[1], [0], [0], [1], [0, 0, 1, 1], [], []>} : vector<8x128xbf16>, vector<128x128xbf16>, vector<8x128xf32> -> vector<8x128xf32>
    %12 = vector.broadcast %9 : vector<1x128xf32> to vector<8x128xf32>
    %13 = arith.addf %11, %12 : vector<8x128xf32>
    %14 = math.absf %13 : vector<8x128xf32>
    %c0_10 = arith.constant 0 : index
    %c0_11 = arith.constant 0 : index
    %15 = vector.load %arg6[%c0_10, %c0_11] : memref<128x128xbf16, #tpu.memory_space<vmem>>, vector<128x128xbf16>
    %c0_12 = arith.constant 0 : index
    %c0_13 = arith.constant 0 : index
    %16 = vector.load %arg7[%c0_12, %c0_13] : memref<1x128xf32, #tpu.memory_space<vmem>>, vector<1x128xf32>
    %17 = arith.truncf %14 : vector<8x128xf32> to vector<8x128xbf16>
    %cst_14 = arith.constant dense<0.000000e+00> : vector<8x128xf32>
    %18 = tpu.matmul %17, %15, %cst_14 {dimension_numbers = #tpu.dot_dimension_numbers<[1], [0], [0], [1], [0, 0, 1, 1], [], []>} : vector<8x128xbf16>, vector<128x128xbf16>, vector<8x128xf32> -> vector<8x128xf32>
    %19 = vector.broadcast %16 : vector<1x128xf32> to vector<8x128xf32>
    %20 = arith.addf %18, %19 : vector<8x128xf32>
    %21 = arith.negf %20 : vector<8x128xf32>
    %22 = math.exp %21 : vector<8x128xf32>
    %cst_15 = arith.constant 1.000000e+00 : f32
    %23 = vector.broadcast %cst_15 : f32 to vector<8x128xf32>
    %24 = arith.addf %23, %22 : vector<8x128xf32>
    %25 = arith.divf %23, %24 : vector<8x128xf32>
    %c0_16 = arith.constant 0 : index
    %c0_17 = arith.constant 0 : index
    %26 = vector.load %arg8[%c0_16, %c0_17] : memref<8x128xf32, #tpu.memory_space<vmem>>, vector<8x128xf32>
    tpu.vector_store %arg8[%c0_16, %c0_17], %25 {strides = array<i32>} : memref<8x128xf32, #tpu.memory_space<vmem>>, vector<8x128xf32>,
    return
  }
  func.func @transform_0(%arg0: i32) -> (i32, i32) {
    %c0_i32 = arith.constant 0 : i32
    %c0_i32_0 = arith.constant 0 : i32
    return %arg0, %c0_i32 : i32, i32
  }
  func.func @transform_1(%arg0: i32) -> (i32, i32) {
    %c0_i32 = arith.constant 0 : i32
    %c0_i32_0 = arith.constant 0 : i32
    %c0_i32_1 = arith.constant 0 : i32
    return %c0_i32, %c0_i32_0 : i32, i32
  }
  func.func @transform_2(%arg0: i32) -> (i32, i32) {
    %c0_i32 = arith.constant 0 : i32
    %c0_i32_0 = arith.constant 0 : i32
    %c0_i32_1 = arith.constant 0 : i32
    return %c0_i32, %c0_i32_0 : i32, i32
  }
  func.func @transform_3(%arg0: i32) -> (i32, i32) {
    %c0_i32 = arith.constant 0 : i32
    %c0_i32_0 = arith.constant 0 : i32
    %c0_i32_1 = arith.constant 0 : i32
    return %c0_i32, %c0_i32_0 : i32, i32
  }
  func.func @transform_4(%arg0: i32) -> (i32, i32) {
    %c0_i32 = arith.constant 0 : i32
    %c0_i32_0 = arith.constant 0 : i32
    %c0_i32_1 = arith.constant 0 : i32
    return %c0_i32, %c0_i32_0 : i32, i32
  }
  func.func @transform_5(%arg0: i32) -> (i32, i32) {
    %c0_i32 = arith.constant 0 : i32
    %c0_i32_0 = arith.constant 0 : i32
    %c0_i32_1 = arith.constant 0 : i32
    return %c0_i32, %c0_i32_0 : i32, i32
  }
  func.func @transform_6(%arg0: i32) -> (i32, i32) {
    %c0_i32 = arith.constant 0 : i32
    %c0_i32_0 = arith.constant 0 : i32
    %c0_i32_1 = arith.constant 0 : i32
    return %c0_i32, %c0_i32_0 : i32, i32
  }
  func.func @transform_7(%arg0: i32) -> (i32, i32) {
    %c0_i32 = arith.constant 0 : i32
    %c0_i32_0 = arith.constant 0 : i32
    return %arg0, %c0_i32 : i32, i32
  }
}

</mosaic_0001>

<llo_original>
// kernel: tpu_custom_call.1
$region0: #{tpu_custom_call.1}
  #allocation0 [shape = 'u32[]', space=smem, size = 0x4, offset = 0x4, fixed_abs, tag = 'smem constant byte address 0x4 - core index']
  #allocation1 [shape = 'u32[144,128]{1,0:T(1,128)}', space=vmem, size = 0x12000, scoped, tag = 'internal scratch']
  %s0 = inlined_call_operand.hbm [shape: f32[8,32], index: 0, kind: input, shape index: {}]
  %s1 = inlined_call_operand.hbm [shape: bf16[32,128], index: 1, kind: input, shape index: {}]
  %s2 = inlined_call_operand.vmem [shape: f32[1,128], index: 2, kind: input, shape index: {}]
  %s3 = inlined_call_operand.hbm [shape: bf16[128,128], index: 3, kind: input, shape index: {}]
  %s4 = inlined_call_operand.vmem [shape: f32[1,128], index: 4, kind: input, shape index: {}]
  %s5 = inlined_call_operand.hbm [shape: bf16[128,128], index: 5, kind: input, shape index: {}]
  %s6 = inlined_call_operand.vmem [shape: f32[1,128], index: 6, kind: input, shape index: {}]
  %s7 = inlined_call_operand.hbm [shape: f32[8,128], index: 7, kind: output, shape index: {}]
  %s8 = sld [smem:[#allocation0]]
  $region54: #{tpu_custom_call.1} parent=0
    _
  %s10 = ssub.s32 1, %s8
  %s11 = scalar_select 0, %s10, %s8
  $region1: #{tpu_custom_call.1} parent=0
    #allocation2 [shape = 'u8[4096]{0}', space=vmem, size = 0x1000, scoped, tag = 'input window, operand 0, single buffered']
    #allocation3 [shape = 's32[1]{0}', space=sflag, size = 0x4, scoped, tag = 'scoped memory for tpu_custom_call.1']
    #allocation4 [shape = 's32[1]{0}', space=sflag, size = 0x4, scoped, tag = 'scoped memory for tpu_custom_call.1']
    #allocation5 [shape = 'u8[8192]{0}', space=vmem, size = 0x2000, scoped, tag = 'input window, operand 1, single buffered']
    #allocation6 [shape = 's32[1]{0}', space=sflag, size = 0x4, scoped, tag = 'scoped memory for tpu_custom_call.1']
    #allocation7 [shape = 'u8[32768]{0}', space=vmem, size = 0x8000, scoped, tag = 'input window, operand 3, single buffered']
    #allocation8 [shape = 'u8[32768]{0}', space=vmem, size = 0x8000, scoped, tag = 'input window, operand 5, single buffered']
    #allocation9 [shape = 's32[1]{0}', space=sflag, size = 0x4, scoped, tag = 'scoped memory for tpu_custom_call.1']
    #allocation10 [shape = 'u8[4096]{0}', space=vmem, size = 0x1000, scoped, tag = 'output window, operand 0, single buffered']
    %12 = vsyncpa [#allocation3], 0
    %13 = vsyncpa [#allocation6], 0
    %14 = vsyncpa [#allocation9], 0
    %15 = vsyncpa [#allocation4], 0
    // Predicated region
    $region2: #{tpu_custom_call.1} parent=1 // pred_check
      _
    $region3: #{tpu_custom_call.1} parent=1 // pred_check_branch
      %17 = sbr.rel (0) target = $region5
    $region4: #{tpu_custom_call.1} parent=1 // pred_region
      %s19 = ssub.s32 128, 128
      %20 = vsyncadd [#allocation3], %s19
      %s22 = sshll.u32 [#allocation2], 4
      %s23 = int_to_ptr.vmem [resolvable:$true] %s22
      %25 = dma.hbm_to_vmem [thread:$0]  %s0, 128, %s23, [#allocation3]
    $region5: #{tpu_custom_call.1} parent=1 // pred_fallthru
      _
    // Predicated region
    $region6: #{tpu_custom_call.1} parent=1 // pred_check
      _
    $region7: #{tpu_custom_call.1} parent=1 // pred_check_branch
      %27 = sbr.rel (0) target = $region9
    $region8: #{tpu_custom_call.1} parent=1 // pred_region
      %s29 = ssub.s32 256, 256
      %30 = vsyncadd [#allocation6], %s29
      %s31 = sshll.u32 [#allocation5], 4
      %s32 = int_to_ptr.vmem [resolvable:$true] %s31
      %37 = dma.hbm_to_vmem [thread:$0]  %s1, 256, %s32, [#allocation6], 64, 64, 4
    $region9: #{tpu_custom_call.1} parent=1 // pred_fallthru
      _
    // Predicated region
    $region10: #{tpu_custom_call.1} parent=1 // pred_check
      _
    $region11: #{tpu_custom_call.1} parent=1 // pred_check_branch
      %39 = sbr.rel (0) target = $region13
    $region12: #{tpu_custom_call.1} parent=1 // pred_region
      _
    $region13: #{tpu_custom_call.1} parent=1 // pred_fallthru
      _
    // Predicated region
    $region14: #{tpu_custom_call.1} parent=1 // pred_check
      _
    $region15: #{tpu_custom_call.1} parent=1 // pred_check_branch
      %41 = sbr.rel (0) target = $region17
    $region16: #{tpu_custom_call.1} parent=1 // pred_region
      %s43 = ssub.s32 1024, 1024
      %44 = vsyncadd [#allocation6], %s43
      %s45 = sshll.u32 [#allocation7], 4
      %s46 = int_to_ptr.vmem [resolvable:$true] %s45
      %51 = dma.hbm_to_vmem [thread:$0]  %s3, 1024, %s46, [#allocation6], 64, 64, 4
    $region17: #{tpu_custom_call.1} parent=1 // pred_fallthru
      _
    // Predicated region
    $region18: #{tpu_custom_call.1} parent=1 // pred_check
      _
    $region19: #{tpu_custom_call.1} parent=1 // pred_check_branch
      %53 = sbr.rel (0) target = $region21
    $region20: #{tpu_custom_call.1} parent=1 // pred_region
      _
    $region21: #{tpu_custom_call.1} parent=1 // pred_fallthru
      _
    // Predicated region
    $region22: #{tpu_custom_call.1} parent=1 // pred_check
      _
    $region23: #{tpu_custom_call.1} parent=1 // pred_check_branch
      %55 = sbr.rel (0) target = $region25
    $region24: #{tpu_custom_call.1} parent=1 // pred_region
      %s57 = ssub.s32 1024, 1024
      %58 = vsyncadd [#allocation9], %s57
      %s59 = sshll.u32 [#allocation8], 4
      %s60 = int_to_ptr.vmem [resolvable:$true] %s59
      %65 = dma.hbm_to_vmem [thread:$0]  %s5, 1024, %s60, [#allocation9], 64, 64, 4
    $region25: #{tpu_custom_call.1} parent=1 // pred_fallthru
      _
    // Predicated region
    $region26: #{tpu_custom_call.1} parent=1 // pred_check
      _
    $region27: #{tpu_custom_call.1} parent=1 // pred_check_branch
      %67 = sbr.rel (0) target = $region29
    $region28: #{tpu_custom_call.1} parent=1 // pred_region
      _
    $region29: #{tpu_custom_call.1} parent=1 // pred_fallthru
      _
    // Predicated region
    $region30: #{tpu_custom_call.1} parent=1 // pred_check
      _
    $region31: #{tpu_custom_call.1} parent=1 // pred_check_branch
      %69 = sbr.rel (0) target = $region33
    $region32: #{tpu_custom_call.1} parent=1 // pred_region
      %70 = dma.done [#allocation3], 128
    $region33: #{tpu_custom_call.1} parent=1 // pred_fallthru
      _
    // Predicated region
    $region34: #{tpu_custom_call.1} parent=1 // pred_check
      _
    $region35: #{tpu_custom_call.1} parent=1 // pred_check_branch
      %72 = sbr.rel (0) target = $region37
    $region36: #{tpu_custom_call.1} parent=1 // pred_region
      %73 = dma.done [#allocation6], 256
    $region37: #{tpu_custom_call.1} parent=1 // pred_fallthru
      _
    // Predicated region
    $region38: #{tpu_custom_call.1} parent=1 // pred_check
      _
    $region39: #{tpu_custom_call.1} parent=1 // pred_check_branch
      %75 = sbr.rel (0) target = $region41
    $region40: #{tpu_custom_call.1} parent=1 // pred_region
      %76 = dma.done [#allocation6], 1024
    $region41: #{tpu_custom_call.1} parent=1 // pred_fallthru
      _
    // Predicated region
    $region42: #{tpu_custom_call.1} parent=1 // pred_check
      _
    $region43: #{tpu_custom_call.1} parent=1 // pred_check_branch
      %78 = sbr.rel (0) target = $region45
    $region44: #{tpu_custom_call.1} parent=1 // pred_region
      %79 = dma.done [#allocation9], 1024
    $region45: #{tpu_custom_call.1} parent=1 // pred_fallthru
      _
    %v81 = vld [vmem:[#allocation2] sm:$0xff]
    %v82 = vld [vmem:[#allocation5] sm:$0xf]
    %v83 = vld [vmem:[#allocation5 + $0x4] sm:$0xf]
    %v84 = vld [vmem:[#allocation5 + $0x8] sm:$0xf]
    %v85 = vld [vmem:[#allocation5 + $0xc] sm:$0xf]
    %v86 = vld [vmem:[%s2] sm:$0x1]
    %v87 = vpack.c.bf16 %v81, %v81
    %v89 = vlaneseq
    %v90 = vshrl.u32 %v89, 7
    %v91 = vsub.s32 0, %v90
    %v92 = vrot.slane %v86, %v91
    %v98 = vunpack.c.l.b16 %v82
    %v99 = vunpack.c.l.b16 %v83
    %v100 = vunpack.c.l.b16 %v84
    %v101 = vunpack.c.l.b16 %v85
    %v102 = vpack.c.b16 %v99, %v98
    %v103 = vpack.c.b16 %v101, %v100
    %vm106 = vcmask 261120
    %v108 = vsel %vm106, %v87, 0
    %110 = vmatprep.subr.bf16.mxu0 0
    %111 = vmatpush1.bf16.msra.mxu0 %v102
    %112 = vmatprep.subr.bf16.mxu0 0
    %113 = vmatpush1.bf16.msra.mxu0 %v103
    %114 = vmatprep.subr.bf16.mxu0 0
    %115 = vmatpush1.bf16.msra.mxu0 0
    %116 = vmatprep.subr.bf16.mxu0 0
    %117 = vmatpush1.bf16.msra.mxu0 0
    %118 = vmatprep.subr.bf16.mxu0 0
    %119 = vmatpush1.bf16.msra.mxu0 0
    %120 = vmatprep.subr.bf16.mxu0 0
    %121 = vmatpush1.bf16.msra.mxu0 0
    %122 = vmatprep.subr.bf16.mxu0 0
    %123 = vmatpush1.bf16.msra.mxu0 0
    %124 = vmatprep.subr.bf16.mxu0 0
    %125 = vmatpush1.bf16.msra.mxu0 0
    %126 = vmatprep.subr.bf16.mxu0 0
    %127 = vmatpush1.bf16.msra.mxu0 0
    %128 = vmatprep.subr.bf16.mxu0 0
    %129 = vmatpush1.bf16.msra.mxu0 0
    %130 = vmatprep.subr.bf16.mxu0 0
    %131 = vmatpush1.bf16.msra.mxu0 0
    %132 = vmatprep.subr.bf16.mxu0 0
    %133 = vmatpush1.bf16.msra.mxu0 0
    %134 = vmatprep.subr.bf16.mxu0 0
    %135 = vmatpush1.bf16.msra.mxu0 0
    %136 = vmatprep.subr.bf16.mxu0 0
    %137 = vmatpush1.bf16.msra.mxu0 0
    %138 = vmatprep.subr.bf16.mxu0 0
    %139 = vmatpush1.bf16.msra.mxu0 0
    %140 = vmatprep.subr.bf16.mxu0 0
    %141 = vmatpush1.bf16.msra.mxu0 0
    %142 = vmatprep.mubr.bf16.mxu0 0
    %143 = vmatmul.mubr.bf16.gmra.mrb[0].mxu0 %v108
    %v144 = vpop.f32.mrb[0].mxu0
    %v145 = vadd.f32 %v92, %v144
    %v146 = vpop.f32.mrb[0].mxu0
    %v147 = vpop.f32.mrb[0].mxu0
    %v148 = vpop.f32.mrb[0].mxu0
    %149 = vdwg.mxu0
    %v150 = vand.u32 2147483647, %v145
    %v151 = vld [vmem:[#allocation7] sm:$0xf]
    %v152 = vld [vmem:[#allocation7 + $0x4] sm:$0xf]
    %v153 = vld [vmem:[#allocation7 + $0x8] sm:$0xf]
    %v154 = vld [vmem:[#allocation7 + $0xc] sm:$0xf]
    %v155 = vld [vmem:[#allocation7 + $0x10] sm:$0xf]
    %v156 = vld [vmem:[#allocation7 + $0x14] sm:$0xf]
    %v157 = vld [vmem:[#allocation7 + $0x18] sm:$0xf]
    %v158 = vld [vmem:[#allocation7 + $0x1c] sm:$0xf]
    %v159 = vld [vmem:[#allocation7 + $0x20] sm:$0xf]
    %v160 = vld [vmem:[#allocation7 + $0x24] sm:$0xf]
    %v161 = vld [vmem:[#allocation7 + $0x28] sm:$0xf]
    %v162 = vld [vmem:[#allocation7 + $0x2c] sm:$0xf]
    %v163 = vld [vmem:[#allocation7 + $0x30] sm:$0xf]
    %v164 = vld [vmem:[#allocation7 + $0x34] sm:$0xf]
    %v165 = vld [vmem:[#allocation7 + $0x38] sm:$0xf]
    %v166 = vld [vmem:[#allocation7 + $0x3c] sm:$0xf]
    %v167 = vld [vmem:[%s4] sm:$0x1]
    %v168 = vpack.c.bf16 %v150, %v150
    %v170 = vlaneseq
    %v171 = vshrl.u32 %v170, 7
    %v172 = vsub.s32 0, %v171
    %v173 = vrot.slane %v167, %v172
    %v191 = vunpack.c.l.b16 %v151
    %v192 = vunpack.c.l.b16 %v152
    %v193 = vunpack.c.l.b16 %v153
    %v194 = vunpack.c.l.b16 %v154
    %v195 = vunpack.c.l.b16 %v155
    %v196 = vunpack.c.l.b16 %v156
    %v197 = vunpack.c.l.b16 %v157
    %v198 = vunpack.c.l.b16 %v158
    %v199 = vunpack.c.l.b16 %v159
    %v200 = vunpack.c.l.b16 %v160
    %v201 = vunpack.c.l.b16 %v161
    %v202 = vunpack.c.l.b16 %v162
    %v203 = vunpack.c.l.b16 %v163
    %v204 = vunpack.c.l.b16 %v164
    %v205 = vunpack.c.l.b16 %v165
    %v206 = vunpack.c.l.b16 %v166
    %v207 = vpack.c.b16 %v192, %v191
    %v208 = vpack.c.b16 %v194, %v193
    %v209 = vpack.c.b16 %v196, %v195
    %v210 = vpack.c.b16 %v198, %v197
    %v211 = vpack.c.b16 %v200, %v199
    %v212 = vpack.c.b16 %v202, %v201
    %v213 = vpack.c.b16 %v204, %v203
    %v214 = vpack.c.b16 %v206, %v205
    %223 = vmatprep.subr.bf16.mxu0 0
    %224 = vmatpush1.bf16.msra.mxu0 %v207
    %225 = vmatprep.subr.bf16.mxu0 0
    %226 = vmatpush1.bf16.msra.mxu0 %v208
    %227 = vmatprep.subr.bf16.mxu0 0
    %228 = vmatpush1.bf16.msra.mxu0 %v209
    %229 = vmatprep.subr.bf16.mxu0 0
    %230 = vmatpush1.bf16.msra.mxu0 %v210
    %231 = vmatprep.subr.bf16.mxu0 0
    %232 = vmatpush1.bf16.msra.mxu0 %v211
    %233 = vmatprep.subr.bf16.mxu0 0
    %234 = vmatpush1.bf16.msra.mxu0 %v212
    %235 = vmatprep.subr.bf16.mxu0 0
    %236 = vmatpush1.bf16.msra.mxu0 %v213
    %237 = vmatprep.subr.bf16.mxu0 0
    %238 = vmatpush1.bf16.msra.mxu0 %v214
    %239 = vmatprep.subr.bf16.mxu0 0
    %240 = vmatpush1.bf16.msra.mxu0 0
    %241 = vmatprep.subr.bf16.mxu0 0
    %242 = vmatpush1.bf16.msra.mxu0 0
    %243 = vmatprep.subr.bf16.mxu0 0
    %244 = vmatpush1.bf16.msra.mxu0 0
    %245 = vmatprep.subr.bf16.mxu0 0
    %246 = vmatpush1.bf16.msra.mxu0 0
    %247 = vmatprep.subr.bf16.mxu0 0
    %248 = vmatpush1.bf16.msra.mxu0 0
    %249 = vmatprep.subr.bf16.mxu0 0
    %250 = vmatpush1.bf16.msra.mxu0 0
    %251 = vmatprep.subr.bf16.mxu0 0
    %252 = vmatpush1.bf16.msra.mxu0 0
    %253 = vmatprep.subr.bf16.mxu0 0
    %254 = vmatpush1.bf16.msra.mxu0 0
    %255 = vmatprep.mubr.bf16.mxu0 0
    %256 = vmatmul.mubr.bf16.gmra.mrb[0].mxu0 %v168
    %v257 = vpop.f32.mrb[0].mxu0
    %v258 = vadd.f32 %v173, %v257
    %v259 = vpop.f32.mrb[0].mxu0
    %v260 = vpop.f32.mrb[0].mxu0
    %v261 = vpop.f32.mrb[0].mxu0
    %262 = vdwg.mxu0
    %v263 = vand.u32 2147483647, %v258
    %v264 = vld [vmem:[#allocation8] sm:$0xf]
    %v265 = vld [vmem:[#allocation8 + $0x4] sm:$0xf]
    %v266 = vld [vmem:[#allocation8 + $0x8] sm:$0xf]
    %v267 = vld [vmem:[#allocation8 + $0xc] sm:$0xf]
    %v268 = vld [vmem:[#allocation8 + $0x10] sm:$0xf]
    %v269 = vld [vmem:[#allocation8 + $0x14] sm:$0xf]
    %v270 = vld [vmem:[#allocation8 + $0x18] sm:$0xf]
    %v271 = vld [vmem:[#allocation8 + $0x1c] sm:$0xf]
    %v272 = vld [vmem:[#allocation8 + $0x20] sm:$0xf]
    %v273 = vld [vmem:[#allocation8 + $0x24] sm:$0xf]
    %v274 = vld [vmem:[#allocation8 + $0x28] sm:$0xf]
    %v275 = vld [vmem:[#allocation8 + $0x2c] sm:$0xf]
    %v276 = vld [vmem:[#allocation8 + $0x30] sm:$0xf]
    %v277 = vld [vmem:[#allocation8 + $0x34] sm:$0xf]
    %v278 = vld [vmem:[#allocation8 + $0x38] sm:$0xf]
    %v279 = vld [vmem:[#allocation8 + $0x3c] sm:$0xf]
    %v280 = vld [vmem:[%s6] sm:$0x1]
    %v281 = vpack.c.bf16 %v263, %v263
    %v283 = vlaneseq
    %v284 = vshrl.u32 %v283, 7
    %v285 = vsub.s32 0, %v284
    %v286 = vrot.slane %v280, %v285
    %v304 = vunpack.c.l.b16 %v264
    %v305 = vunpack.c.l.b16 %v265
    %v306 = vunpack.c.l.b16 %v266
    %v307 = vunpack.c.l.b16 %v267
    %v308 = vunpack.c.l.b16 %v268
    %v309 = vunpack.c.l.b16 %v269
    %v310 = vunpack.c.l.b16 %v270
    %v311 = vunpack.c.l.b16 %v271
    %v312 = vunpack.c.l.b16 %v272
    %v313 = vunpack.c.l.b16 %v273
    %v314 = vunpack.c.l.b16 %v274
    %v315 = vunpack.c.l.b16 %v275
    %v316 = vunpack.c.l.b16 %v276
    %v317 = vunpack.c.l.b16 %v277
    %v318 = vunpack.c.l.b16 %v278
    %v319 = vunpack.c.l.b16 %v279
    %v320 = vpack.c.b16 %v305, %v304
    %v321 = vpack.c.b16 %v307, %v306
    %v322 = vpack.c.b16 %v309, %v308
    %v323 = vpack.c.b16 %v311, %v310
    %v324 = vpack.c.b16 %v313, %v312
    %v325 = vpack.c.b16 %v315, %v314
    %v326 = vpack.c.b16 %v317, %v316
    %v327 = vpack.c.b16 %v319, %v318
    %336 = vmatprep.subr.bf16.mxu0 0
    %337 = vmatpush1.bf16.msra.mxu0 %v320
    %338 = vmatprep.subr.bf16.mxu0 0
    %339 = vmatpush1.bf16.msra.mxu0 %v321
    %340 = vmatprep.subr.bf16.mxu0 0
    %341 = vmatpush1.bf16.msra.mxu0 %v322
    %342 = vmatprep.subr.bf16.mxu0 0
    %343 = vmatpush1.bf16.msra.mxu0 %v323
    %344 = vmatprep.subr.bf16.mxu0 0
    %345 = vmatpush1.bf16.msra.mxu0 %v324
    %346 = vmatprep.subr.bf16.mxu0 0
    %347 = vmatpush1.bf16.msra.mxu0 %v325
    %348 = vmatprep.subr.bf16.mxu0 0
    %349 = vmatpush1.bf16.msra.mxu0 %v326
    %350 = vmatprep.subr.bf16.mxu0 0
    %351 = vmatpush1.bf16.msra.mxu0 %v327
    %352 = vmatprep.subr.bf16.mxu0 0
    %353 = vmatpush1.bf16.msra.mxu0 0
    %354 = vmatprep.subr.bf16.mxu0 0
    %355 = vmatpush1.bf16.msra.mxu0 0
    %356 = vmatprep.subr.bf16.mxu0 0
    %357 = vmatpush1.bf16.msra.mxu0 0
    %358 = vmatprep.subr.bf16.mxu0 0
    %359 = vmatpush1.bf16.msra.mxu0 0
    %360 = vmatprep.subr.bf16.mxu0 0
    %361 = vmatpush1.bf16.msra.mxu0 0
    %362 = vmatprep.subr.bf16.mxu0 0
    %363 = vmatpush1.bf16.msra.mxu0 0
    %364 = vmatprep.subr.bf16.mxu0 0
    %365 = vmatpush1.bf16.msra.mxu0 0
    %366 = vmatprep.subr.bf16.mxu0 0
    %367 = vmatpush1.bf16.msra.mxu0 0
    %368 = vmatprep.mubr.bf16.mxu0 0
    %369 = vmatmul.mubr.bf16.gmra.mrb[0].mxu0 %v281
    %v370 = vpop.f32.mrb[0].mxu0
    %v371 = vadd.f32 %v286, %v370
    %v372 = vpop.f32.mrb[0].mxu0
    %v373 = vpop.f32.mrb[0].mxu0
    %v374 = vpop.f32.mrb[0].mxu0
    %375 = vdwg.mxu0
    %v376 = vxor.u32 %v371, 2147483648
    %v377 = vmul.f32 %v376, 1.442695
    %v378 = vpow.pop %v377
    %v379 = vadd.f32 %v378, 1.0
    %v380 = vrcp.pop %v379
    %v381 = vmul.f32 1.0, %v380
    %382 = vst [vmem:[#allocation10] sm:$0xff] %v381
    // Predicated region
    $region46: #{tpu_custom_call.1} parent=1 // pred_check
      _
    $region47: #{tpu_custom_call.1} parent=1 // pred_check_branch
      %384 = sbr.rel (0) target = $region49
    $region48: #{tpu_custom_call.1} parent=1 // pred_region
      %s386 = ssub.s32 128, 128
      %387 = vsyncadd [#allocation4], %s386
      %s389 = sshll.u32 [#allocation10], 4
      %s390 = int_to_ptr.vmem [resolvable:$true] %s389
      %392 = dma.vmem_to_hbm [thread:$0]  %s390, 128, %s7, [#allocation4]
    $region49: #{tpu_custom_call.1} parent=1 // pred_fallthru
      _
    // Predicated region
    $region50: #{tpu_custom_call.1} parent=1 // pred_check
      _
    $region51: #{tpu_custom_call.1} parent=1 // pred_check_branch
      %394 = sbr.rel (0) target = $region53
    $region52: #{tpu_custom_call.1} parent=1 // pred_region
      %395 = dma.done [#allocation4], 128
    $region53: #{tpu_custom_call.1} parent=1 // pred_fallthru
      _
    %396 = vsyncpa [#allocation3], 1
    %397 = vsyncpa [#allocation6], 1
    %398 = vsyncpa [#allocation9], 1
    %399 = vsyncpa [#allocation4], 1

// kernel: tpu_custom_call.1
$region0: #{tpu_custom_call.1}
  #allocation0 [shape = 'u32[]', space=smem, size = 0x4, offset = 0x4, fixed_abs, tag = 'smem constant byte address 0x4 - core index']
  #allocation1 [shape = 'u32[144,128]{1,0:T(1,128)}', space=vmem, size = 0x12000, scoped, tag = 'internal scratch']
  %s0 = inlined_call_operand.hbm [shape: f32[8,32], index: 0, kind: input, shape index: {}]
  %s1 = inlined_call_operand.hbm [shape: bf16[32,128], index: 1, kind: input, shape index: {}]
  %s2 = inlined_call_operand.vmem [shape: f32[1,128], index: 2, kind: input, shape index: {}]
  %s3 = inlined_call_operand.hbm [shape: bf16[128,128], index: 3, kind: input, shape index: {}]
  %s4 = inlined_call_operand.vmem [shape: f32[1,128], index: 4, kind: input, shape index: {}]
  %s5 = inlined_call_operand.hbm [shape: bf16[128,128], index: 5, kind: input, shape index: {}]
  %s6 = inlined_call_operand.vmem [shape: f32[1,128], index: 6, kind: input, shape index: {}]
  %s7 = inlined_call_operand.hbm [shape: f32[8,128], index: 7, kind: output, shape index: {}]
  %s8 = sld [smem:[#allocation0]]
  $region54: #{tpu_custom_call.1} parent=0
    _
  %s10 = ssub.s32 1, %s8
  %s11 = scalar_select 0, %s10, %s8
  $region1: #{tpu_custom_call.1} parent=0
    #allocation2 [shape = 'u8[4096]{0}', space=vmem, size = 0x1000, scoped, tag = 'input window, operand 0, single buffered']
    #allocation3 [shape = 's32[1]{0}', space=sflag, size = 0x4, scoped, tag = 'scoped memory for tpu_custom_call.1']
    #allocation4 [shape = 's32[1]{0}', space=sflag, size = 0x4, scoped, tag = 'scoped memory for tpu_custom_call.1']
    #allocation5 [shape = 'u8[8192]{0}', space=vmem, size = 0x2000, scoped, tag = 'input window, operand 1, single buffered']
    #allocation6 [shape = 's32[1]{0}', space=sflag, size = 0x4, scoped, tag = 'scoped memory for tpu_custom_call.1']
    #allocation7 [shape = 'u8[32768]{0}', space=vmem, size = 0x8000, scoped, tag = 'input window, operand 3, single buffered']
    #allocation8 [shape = 'u8[32768]{0}', space=vmem, size = 0x8000, scoped, tag = 'input window, operand 5, single buffered']
    #allocation9 [shape = 's32[1]{0}', space=sflag, size = 0x4, scoped, tag = 'scoped memory for tpu_custom_call.1']
    #allocation10 [shape = 'u8[4096]{0}', space=vmem, size = 0x1000, scoped, tag = 'output window, operand 0, single buffered']
    %12 = vsyncpa [#allocation3], 0
    %13 = vsyncpa [#allocation6], 0
    %14 = vsyncpa [#allocation9], 0
    %15 = vsyncpa [#allocation4], 0
    // Predicated region
    $region2: #{tpu_custom_call.1} parent=1 // pred_check
      _
    $region3: #{tpu_custom_call.1} parent=1 // pred_check_branch
      %17 = sbr.rel (0) target = $region5
    $region4: #{tpu_custom_call.1} parent=1 // pred_region
      %s19 = ssub.s32 128, 128
      %20 = vsyncadd [#allocation3], %s19
      %s22 = sshll.u32 [#allocation2], 4
      %s23 = int_to_ptr.vmem [resolvable:$true] %s22
      %25 = dma.hbm_to_vmem [thread:$0]  %s0, 128, %s23, [#allocation3]
    $region5: #{tpu_custom_call.1} parent=1 // pred_fallthru
      _
    // Predicated region
    $region6: #{tpu_custom_call.1} parent=1 // pred_check
      _
    $region7: #{tpu_custom_call.1} parent=1 // pred_check_branch
      %27 = sbr.rel (0) target = $region9
    $region8: #{tpu_custom_call.1} parent=1 // pred_region
      %s29 = ssub.s32 256, 256
      %30 = vsyncadd [#allocation6], %s29
      %s31 = sshll.u32 [#allocation5], 4
      %s32 = int_to_ptr.vmem [resolvable:$true] %s31
      %37 = dma.hbm_to_vmem [thread:$0]  %s1, 256, %s32, [#allocation6], 64, 64, 4
    $region9: #{tpu_custom_call.1} parent=1 // pred_fallthru
      _
    // Predicated region
    $region10: #{tpu_custom_call.1} parent=1 // pred_check
      _
    $region11: #{tpu_custom_call.1} parent=1 // pred_check_branch
      %39 = sbr.rel (0) target = $region13
    $region12: #{tpu_custom_call.1} parent=1 // pred_region
      _
    $region13: #{tpu_custom_call.1} parent=1 // pred_fallthru
      _
    // Predicated region
    $region14: #{tpu_custom_call.1} parent=1 // pred_check
      _
    $region15: #{tpu_custom_call.1} parent=1 // pred_check_branch
      %41 = sbr.rel (0) target = $region17
    $region16: #{tpu_custom_call.1} parent=1 // pred_region
      %s43 = ssub.s32 1024, 1024
      %44 = vsyncadd [#allocation6], %s43
      %s45 = sshll.u32 [#allocation7], 4
      %s46 = int_to_ptr.vmem [resolvable:$true] %s45
      %51 = dma.hbm_to_vmem [thread:$0]  %s3, 1024, %s46, [#allocation6], 64, 64, 4
    $region17: #{tpu_custom_call.1} parent=1 // pred_fallthru
      _
    // Predicated region
    $region18: #{tpu_custom_call.1} parent=1 // pred_check
      _
    $region19: #{tpu_custom_call.1} parent=1 // pred_check_branch
      %53 = sbr.rel (0) target = $region21
    $region20: #{tpu_custom_call.1} parent=1 // pred_region
      _
    $region21: #{tpu_custom_call.1} parent=1 // pred_fallthru
      _
    // Predicated region
    $region22: #{tpu_custom_call.1} parent=1 // pred_check
      _
    $region23: #{tpu_custom_call.1} parent=1 // pred_check_branch
      %55 = sbr.rel (0) target = $region25
    $region24: #{tpu_custom_call.1} parent=1 // pred_region
      %s57 = ssub.s32 1024, 1024
      %58 = vsyncadd [#allocation9], %s57
      %s59 = sshll.u32 [#allocation8], 4
      %s60 = int_to_ptr.vmem [resolvable:$true] %s59
      %65 = dma.hbm_to_vmem [thread:$0]  %s5, 1024, %s60, [#allocation9], 64, 64, 4
    $region25: #{tpu_custom_call.1} parent=1 // pred_fallthru
      _
    // Predicated region
    $region26: #{tpu_custom_call.1} parent=1 // pred_check
      _
    $region27: #{tpu_custom_call.1} parent=1 // pred_check_branch
      %67 = sbr.rel (0) target = $region29
    $region28: #{tpu_custom_call.1} parent=1 // pred_region
      _
    $region29: #{tpu_custom_call.1} parent=1 // pred_fallthru
      _
    // Predicated region
    $region30: #{tpu_custom_call.1} parent=1 // pred_check
      _
    $region31: #{tpu_custom_call.1} parent=1 // pred_check_branch
      %69 = sbr.rel (0) target = $region33
    $region32: #{tpu_custom_call.1} parent=1 // pred_region
      %70 = dma.done [#allocation3], 128
    $region33: #{tpu_custom_call.1} parent=1 // pred_fallthru
      _
    // Predicated region
    $region34: #{tpu_custom_call.1} parent=1 // pred_check
      _
    $region35: #{tpu_custom_call.1} parent=1 // pred_check_branch
      %72 = sbr.rel (0) target = $region37
    $region36: #{tpu_custom_call.1} parent=1 // pred_region
      %73 = dma.done [#allocation6], 256
    $region37: #{tpu_custom_call.1} parent=1 // pred_fallthru
      _
    // Predicated region
    $region38: #{tpu_custom_call.1} parent=1 // pred_check
      _
    $region39: #{tpu_custom_call.1} parent=1 // pred_check_branch
      %75 = sbr.rel (0) target = $region41
    $region40: #{tpu_custom_call.1} parent=1 // pred_region
      %76 = dma.done [#allocation6], 1024
    $region41: #{tpu_custom_call.1} parent=1 // pred_fallthru
      _
    // Predicated region
    $region42: #{tpu_custom_call.1} parent=1 // pred_check
      _
    $region43: #{tpu_custom_call.1} parent=1 // pred_check_branch
      %78 = sbr.rel (0) target = $region45
    $region44: #{tpu_custom_call.1} parent=1 // pred_region
      %79 = dma.done [#allocation9], 1024
    $region45: #{tpu_custom_call.1} parent=1 // pred_fallthru
      _
    %v81 = vld [vmem:[#allocation2] sm:$0xff]
    %v82 = vld [vmem:[#allocation5] sm:$0xf]
    %v83 = vld [vmem:[#allocation5 + $0x4] sm:$0xf]
    %v84 = vld [vmem:[#allocation5 + $0x8] sm:$0xf]
    %v85 = vld [vmem:[#allocation5 + $0xc] sm:$0xf]
    %v86 = vld [vmem:[%s2] sm:$0x1]
    %v87 = vpack.c.bf16 %v81, %v81
    %v89 = vlaneseq
    %v90 = vshrl.u32 %v89, 7
    %v91 = vsub.s32 0, %v90
    %v92 = vrot.slane %v86, %v91
    %v98 = vunpack.c.l.b16 %v82
    %v99 = vunpack.c.l.b16 %v83
    %v100 = vunpack.c.l.b16 %v84
    %v101 = vunpack.c.l.b16 %v85
    %v102 = vpack.c.b16 %v99, %v98
    %v103 = vpack.c.b16 %v101, %v100
    %vm106 = vcmask 261120
    %v108 = vsel %vm106, %v87, 0
    %110 = vmatprep.subr.bf16.mxu0 0
    %111 = vmatpush1.bf16.msra.mxu0 %v102
    %112 = vmatprep.subr.bf16.mxu0 0
    %113 = vmatpush1.bf16.msra.mxu0 %v103
    %114 = vmatprep.subr.bf16.mxu0 0
    %115 = vmatpush1.bf16.msra.mxu0 0
    %116 = vmatprep.subr.bf16.mxu0 0
    %117 = vmatpush1.bf16.msra.mxu0 0
    %118 = vmatprep.subr.bf16.mxu0 0
    %119 = vmatpush1.bf16.msra.mxu0 0
    %120 = vmatprep.subr.bf16.mxu0 0
    %121 = vmatpush1.bf16.msra.mxu0 0
    %122 = vmatprep.subr.bf16.mxu0 0
    %123 = vmatpush1.bf16.msra.mxu0 0
    %124 = vmatprep.subr.bf16.mxu0 0
    %125 = vmatpush1.bf16.msra.mxu0 0
    %126 = vmatprep.subr.bf16.mxu0 0
    %127 = vmatpush1.bf16.msra.mxu0 0
    %128 = vmatprep.subr.bf16.mxu0 0
    %129 = vmatpush1.bf16.msra.mxu0 0
    %130 = vmatprep.subr.bf16.mxu0 0
    %131 = vmatpush1.bf16.msra.mxu0 0
    %132 = vmatprep.subr.bf16.mxu0 0
    %133 = vmatpush1.bf16.msra.mxu0 0
    %134 = vmatprep.subr.bf16.mxu0 0
    %135 = vmatpush1.bf16.msra.mxu0 0
    %136 = vmatprep.subr.bf16.mxu0 0
    %137 = vmatpush1.bf16.msra.mxu0 0
    %138 = vmatprep.subr.bf16.mxu0 0
    %139 = vmatpush1.bf16.msra.mxu0 0
    %140 = vmatprep.subr.bf16.mxu0 0
    %141 = vmatpush1.bf16.msra.mxu0 0
    %142 = vmatprep.mubr.bf16.mxu0 0
    %143 = vmatmul.mubr.bf16.gmra.mrb[0].mxu0 %v108
    %v144 = vpop.f32.mrb[0].mxu0
    %v145 = vadd.f32 %v92, %v144
    %v146 = vpop.f32.mrb[0].mxu0
    %v147 = vpop.f32.mrb[0].mxu0
    %v148 = vpop.f32.mrb[0].mxu0
    %149 = vdwg.mxu0
    %v150 = vand.u32 2147483647, %v145
    %v151 = vld [vmem:[#allocation7] sm:$0xf]
    %v152 = vld [vmem:[#allocation7 + $0x4] sm:$0xf]
    %v153 = vld [vmem:[#allocation7 + $0x8] sm:$0xf]
    %v154 = vld [vmem:[#allocation7 + $0xc] sm:$0xf]
    %v155 = vld [vmem:[#allocation7 + $0x10] sm:$0xf]
    %v156 = vld [vmem:[#allocation7 + $0x14] sm:$0xf]
    %v157 = vld [vmem:[#allocation7 + $0x18] sm:$0xf]
    %v158 = vld [vmem:[#allocation7 + $0x1c] sm:$0xf]
    %v159 = vld [vmem:[#allocation7 + $0x20] sm:$0xf]
    %v160 = vld [vmem:[#allocation7 + $0x24] sm:$0xf]
    %v161 = vld [vmem:[#allocation7 + $0x28] sm:$0xf]
    %v162 = vld [vmem:[#allocation7 + $0x2c] sm:$0xf]
    %v163 = vld [vmem:[#allocation7 + $0x30] sm:$0xf]
    %v164 = vld [vmem:[#allocation7 + $0x34] sm:$0xf]
    %v165 = vld [vmem:[#allocation7 + $0x38] sm:$0xf]
    %v166 = vld [vmem:[#allocation7 + $0x3c] sm:$0xf]
    %v167 = vld [vmem:[%s4] sm:$0x1]
    %v168 = vpack.c.bf16 %v150, %v150
    %v170 = vlaneseq
    %v171 = vshrl.u32 %v170, 7
    %v172 = vsub.s32 0, %v171
    %v173 = vrot.slane %v167, %v172
    %v191 = vunpack.c.l.b16 %v151
    %v192 = vunpack.c.l.b16 %v152
    %v193 = vunpack.c.l.b16 %v153
    %v194 = vunpack.c.l.b16 %v154
    %v195 = vunpack.c.l.b16 %v155
    %v196 = vunpack.c.l.b16 %v156
    %v197 = vunpack.c.l.b16 %v157
    %v198 = vunpack.c.l.b16 %v158
    %v199 = vunpack.c.l.b16 %v159
    %v200 = vunpack.c.l.b16 %v160
    %v201 = vunpack.c.l.b16 %v161
    %v202 = vunpack.c.l.b16 %v162
    %v203 = vunpack.c.l.b16 %v163
    %v204 = vunpack.c.l.b16 %v164
    %v205 = vunpack.c.l.b16 %v165
    %v206 = vunpack.c.l.b16 %v166
    %v207 = vpack.c.b16 %v192, %v191
    %v208 = vpack.c.b16 %v194, %v193
    %v209 = vpack.c.b16 %v196, %v195
    %v210 = vpack.c.b16 %v198, %v197
    %v211 = vpack.c.b16 %v200, %v199
    %v212 = vpack.c.b16 %v202, %v201
    %v213 = vpack.c.b16 %v204, %v203
    %v214 = vpack.c.b16 %v206, %v205
    %223 = vmatprep.subr.bf16.mxu0 0
    %224 = vmatpush1.bf16.msra.mxu0 %v207
    %225 = vmatprep.subr.bf16.mxu0 0
    %226 = vmatpush1.bf16.msra.mxu0 %v208
    %227 = vmatprep.subr.bf16.mxu0 0
    %228 = vmatpush1.bf16.msra.mxu0 %v209
    %229 = vmatprep.subr.bf16.mxu0 0
    %230 = vmatpush1.bf16.msra.mxu0 %v210
    %231 = vmatprep.subr.bf16.mxu0 0
    %232 = vmatpush1.bf16.msra.mxu0 %v211
    %233 = vmatprep.subr.bf16.mxu0 0
    %234 = vmatpush1.bf16.msra.mxu0 %v212
    %235 = vmatprep.subr.bf16.mxu0 0
    %236 = vmatpush1.bf16.msra.mxu0 %v213
    %237 = vmatprep.subr.bf16.mxu0 0
    %238 = vmatpush1.bf16.msra.mxu0 %v214
    %239 = vmatprep.subr.bf16.mxu0 0
    %240 = vmatpush1.bf16.msra.mxu0 0
    %241 = vmatprep.subr.bf16.mxu0 0
    %242 = vmatpush1.bf16.msra.mxu0 0
    %243 = vmatprep.subr.bf16.mxu0 0
    %244 = vmatpush1.bf16.msra.mxu0 0
    %245 = vmatprep.subr.bf16.mxu0 0
    %246 = vmatpush1.bf16.msra.mxu0 0
    %247 = vmatprep.subr.bf16.mxu0 0
    %248 = vmatpush1.bf16.msra.mxu0 0
    %249 = vmatprep.subr.bf16.mxu0 0
    %250 = vmatpush1.bf16.msra.mxu0 0
    %251 = vmatprep.subr.bf16.mxu0 0
    %252 = vmatpush1.bf16.msra.mxu0 0
    %253 = vmatprep.subr.bf16.mxu0 0
    %254 = vmatpush1.bf16.msra.mxu0 0
    %255 = vmatprep.mubr.bf16.mxu0 0
    %256 = vmatmul.mubr.bf16.gmra.mrb[0].mxu0 %v168
    %v257 = vpop.f32.mrb[0].mxu0
    %v258 = vadd.f32 %v173, %v257
    %v259 = vpop.f32.mrb[0].mxu0
    %v260 = vpop.f32.mrb[0].mxu0
    %v261 = vpop.f32.mrb[0].mxu0
    %262 = vdwg.mxu0
    %v263 = vand.u32 2147483647, %v258
    %v264 = vld [vmem:[#allocation8] sm:$0xf]
    %v265 = vld [vmem:[#allocation8 + $0x4] sm:$0xf]
    %v266 = vld [vmem:[#allocation8 + $0x8] sm:$0xf]
    %v267 = vld [vmem:[#allocation8 + $0xc] sm:$0xf]
    %v268 = vld [vmem:[#allocation8 + $0x10] sm:$0xf]
    %v269 = vld [vmem:[#allocation8 + $0x14] sm:$0xf]
    %v270 = vld [vmem:[#allocation8 + $0x18] sm:$0xf]
    %v271 = vld [vmem:[#allocation8 + $0x1c] sm:$0xf]
    %v272 = vld [vmem:[#allocation8 + $0x20] sm:$0xf]
    %v273 = vld [vmem:[#allocation8 + $0x24] sm:$0xf]
    %v274 = vld [vmem:[#allocation8 + $0x28] sm:$0xf]
    %v275 = vld [vmem:[#allocation8 + $0x2c] sm:$0xf]
    %v276 = vld [vmem:[#allocation8 + $0x30] sm:$0xf]
    %v277 = vld [vmem:[#allocation8 + $0x34] sm:$0xf]
    %v278 = vld [vmem:[#allocation8 + $0x38] sm:$0xf]
    %v279 = vld [vmem:[#allocation8 + $0x3c] sm:$0xf]
    %v280 = vld [vmem:[%s6] sm:$0x1]
    %v281 = vpack.c.bf16 %v263, %v263
    %v283 = vlaneseq
    %v284 = vshrl.u32 %v283, 7
    %v285 = vsub.s32 0, %v284
    %v286 = vrot.slane %v280, %v285
    %v304 = vunpack.c.l.b16 %v264
    %v305 = vunpack.c.l.b16 %v265
    %v306 = vunpack.c.l.b16 %v266
    %v307 = vunpack.c.l.b16 %v267
    %v308 = vunpack.c.l.b16 %v268
    %v309 = vunpack.c.l.b16 %v269
    %v310 = vunpack.c.l.b16 %v270
    %v311 = vunpack.c.l.b16 %v271
    %v312 = vunpack.c.l.b16 %v272
    %v313 = vunpack.c.l.b16 %v273
    %v314 = vunpack.c.l.b16 %v274
    %v315 = vunpack.c.l.b16 %v275
    %v316 = vunpack.c.l.b16 %v276
    %v317 = vunpack.c.l.b16 %v277
    %v318 = vunpack.c.l.b16 %v278
    %v319 = vunpack.c.l.b16 %v279
    %v320 = vpack.c.b16 %v305, %v304
    %v321 = vpack.c.b16 %v307, %v306
    %v322 = vpack.c.b16 %v309, %v308
    %v323 = vpack.c.b16 %v311, %v310
    %v324 = vpack.c.b16 %v313, %v312
    %v325 = vpack.c.b16 %v315, %v314
    %v326 = vpack.c.b16 %v317, %v316
    %v327 = vpack.c.b16 %v319, %v318
    %336 = vmatprep.subr.bf16.mxu0 0
    %337 = vmatpush1.bf16.msra.mxu0 %v320
    %338 = vmatprep.subr.bf16.mxu0 0
    %339 = vmatpush1.bf16.msra.mxu0 %v321
    %340 = vmatprep.subr.bf16.mxu0 0
    %341 = vmatpush1.bf16.msra.mxu0 %v322
    %342 = vmatprep.subr.bf16.mxu0 0
    %343 = vmatpush1.bf16.msra.mxu0 %v323
    %344 = vmatprep.subr.bf16.mxu0 0
    %345 = vmatpush1.bf16.msra.mxu0 %v324
    %346 = vmatprep.subr.bf16.mxu0 0
    %347 = vmatpush1.bf16.msra.mxu0 %v325
    %348 = vmatprep.subr.bf16.mxu0 0
    %349 = vmatpush1.bf16.msra.mxu0 %v326
    %350 = vmatprep.subr.bf16.mxu0 0
    %351 = vmatpush1.bf16.msra.mxu0 %v327
    %352 = vmatprep.subr.bf16.mxu0 0
    %353 = vmatpush1.bf16.msra.mxu0 0
    %354 = vmatprep.subr.bf16.mxu0 0
    %355 = vmatpush1.bf16.msra.mxu0 0
    %356 = vmatprep.subr.bf16.mxu0 0
    %357 = vmatpush1.bf16.msra.mxu0 0
    %358 = vmatprep.subr.bf16.mxu0 0
    %359 = vmatpush1.bf16.msra.mxu0 0
    %360 = vmatprep.subr.bf16.mxu0 0
    %361 = vmatpush1.bf16.msra.mxu0 0
    %362 = vmatprep.subr.bf16.mxu0 0
    %363 = vmatpush1.bf16.msra.mxu0 0
    %364 = vmatprep.subr.bf16.mxu0 0
    %365 = vmatpush1.bf16.msra.mxu0 0
    %366 = vmatprep.subr.bf16.mxu0 0
    %367 = vmatpush1.bf16.msra.mxu0 0
    %368 = vmatprep.mubr.bf16.mxu0 0
    %369 = vmatmul.mubr.bf16.gmra.mrb[0].mxu0 %v281
    %v370 = vpop.f32.mrb[0].mxu0
    %v371 = vadd.f32 %v286, %v370
    %v372 = vpop.f32.mrb[0].mxu0
    %v373 = vpop.f32.mrb[0].mxu0
    %v374 = vpop.f32.mrb[0].mxu0
    %375 = vdwg.mxu0
    %v376 = vxor.u32 %v371, 2147483648
    %v377 = vmul.f32 %v376, 1.442695
    %v378 = vpow.pop %v377
    %v379 = vadd.f32 %v378, 1.0
    %v380 = vrcp.pop %v379
    %v381 = vmul.f32 1.0, %v380
    %382 = vst [vmem:[#allocation10] sm:$0xff] %v381
    // Predicated region
    $region46: #{tpu_custom_call.1} parent=1 // pred_check
      _
    $region47: #{tpu_custom_call.1} parent=1 // pred_check_branch
      %384 = sbr.rel (0) target = $region49
    $region48: #{tpu_custom_call.1} parent=1 // pred_region
      %s386 = ssub.s32 128, 128
      %387 = vsyncadd [#allocation4], %s386
      %s389 = sshll.u32 [#allocation10], 4
      %s390 = int_to_ptr.vmem [resolvable:$true] %s389
      %392 = dma.vmem_to_hbm [thread:$0]  %s390, 128, %s7, [#allocation4]
    $region49: #{tpu_custom_call.1} parent=1 // pred_fallthru
      _
    // Predicated region
    $region50: #{tpu_custom_call.1} parent=1 // pred_check
      _
    $region51: #{tpu_custom_call.1} parent=1 // pred_check_branch
      %394 = sbr.rel (0) target = $region53
    $region52: #{tpu_custom_call.1} parent=1 // pred_region
      %395 = dma.done [#allocation4], 128
    $region53: #{tpu_custom_call.1} parent=1 // pred_fallthru
      _
    %396 = vsyncpa [#allocation3], 1
    %397 = vsyncpa [#allocation6], 1
    %398 = vsyncpa [#allocation9], 1
    %399 = vsyncpa [#allocation4], 1

</llo_original>
